<compile_context>
chip_gen: v7x
topology: tpu7x:2x2x1
jax: 0.10.0
libtpu: 0.0.40
codegen_flags: <defaults>
</compile_context>

<pallas_src>
import functools

import jax
import jax.numpy as jnp
from jax.experimental import pallas as pl
from jax.experimental.pallas import tpu as pltpu


def _round_up(x, m):
    return (x + m - 1) // m * m


def _mlp_kernel(xv_ref, xh_ref, wv1_ref, wv2_ref, wh1_ref, wh2_ref,
                wc1a_ref, wc1b_ref, wc2_ref, b_ref, out_ref):
    f32 = jnp.float32
    bf16 = jnp.bfloat16

    H = wv1_ref.shape[1]
    O = wc2_ref.shape[1]

    # Inputs arrive f32 from HBM; cast to bf16 in-register for the MXU.
    xv = xv_ref[...].astype(bf16)
    xh = xh_ref[...].astype(bf16)

    # ---- values branch (fc_values1 -> ReLU -> fc_values2 -> ReLU) ----
    hv = jnp.dot(xv, wv1_ref[...], preferred_element_type=f32) + b_ref[0:1, :H]
    hv = jnp.maximum(hv, 0.0)
    hv = jnp.dot(hv.astype(bf16), wv2_ref[...], preferred_element_type=f32) + b_ref[2:3, :H]
    hv = jnp.maximum(hv, 0.0)

    # ---- headers branch (fc_headers1 -> ReLU -> fc_headers2 -> ReLU) ----
    hh = jnp.dot(xh, wh1_ref[...], preferred_element_type=f32) + b_ref[1:2, :H]
    hh = jnp.maximum(hh, 0.0)
    hh = jnp.dot(hh.astype(bf16), wh2_ref[...], preferred_element_type=f32) + b_ref[3:4, :H]
    hh = jnp.maximum(hh, 0.0)

    # ---- fc_combined1: concat([hv, hh]) @ wc1  ==  hv @ wc1[:H] + hh @ wc1[H:] ----
    hc = (jnp.dot(hv.astype(bf16), wc1a_ref[...], preferred_element_type=f32)
          + jnp.dot(hh.astype(bf16), wc1b_ref[...], preferred_element_type=f32)
          + b_ref[4:5, :H])
    hc = jnp.maximum(hc, 0.0)

    # ---- fc_combined2 (no ReLU) ----
    out = jnp.dot(hc.astype(bf16), wc2_ref[...], preferred_element_type=f32) + b_ref[5:6, :O]
    out_ref[...] = out.astype(out_ref.dtype)


@functools.partial(jax.jit, static_argnames=("block_m",))
def sentence_transformer_forward(x_values, x_headers, packed, *, block_m=None):
    B, Dv = x_values.shape
    _, Dh = x_headers.shape
    H = packed["wv1"].shape[1]
    O = packed["wc2"].shape[1]

    # Batch tile selection: big tiles amortize the ~0.35 us/step pipeline
    # overhead; force >= 2 steps for B >= 32 so both v7x TensorCores get work.
    if block_m is None:
        block_m = min(1024, _round_up(B, 16))
    block_m = max(16, _round_up(block_m, 16))
    n_steps = pl.cdiv(B, block_m)
    if n_steps < 2 and B >= 32:
        block_m = max(16, _round_up(pl.cdiv(B, 2), 16))
        n_steps = pl.cdiv(B, block_m)
    grid = (n_steps,)

    x_map = lambda i: (i, 0)

    def resident(arr):
        # Full-array block, constant index_map -> stays resident across steps.
        return pl.BlockSpec(arr.shape, lambda i: (0, 0))

    in_specs = [
        pl.BlockSpec((block_m, Dv), x_map),     # x_values tile (f32)
        pl.BlockSpec((block_m, Dh), x_map),     # x_headers tile (f32)
        resident(packed["wv1"]),
        resident(packed["wv2"]),
        resident(packed["wh1"]),
        resident(packed["wh2"]),
        resident(packed["wc1a"]),
        resident(packed["wc1b"]),
        resident(packed["wc2"]),
        resident(packed["bias"]),
    ]
    out_spec = pl.BlockSpec((block_m, O), x_map)

    out = pl.pallas_call(
        _mlp_kernel,
        out_shape=jax.ShapeDtypeStruct((B, O), jnp.float32),
        grid_spec=pltpu.PrefetchScalarGridSpec(
            num_scalar_prefetch=0,
            grid=grid,
            in_specs=in_specs,
            out_specs=out_spec,
        ),
        compiler_params=pltpu.CompilerParams(
            dimension_semantics=("parallel",),
        ),
    )(x_values, x_headers,
      packed["wv1"], packed["wv2"], packed["wh1"], packed["wh2"],
      packed["wc1a"], packed["wc1b"], packed["wc2"], packed["bias"])

    return out


def init_params(key, input_size_values, input_size_headers, hidden_size, output_size):
    """Canonical f32 params mimicking nn.Linear init U(-1/sqrt(fan_in), 1/sqrt(fan_in)).
    Weights are stored pre-transposed as [in_features, out_features]."""
    def linear(k, fan_in, fan_out):
        kw, kb = jax.random.split(k)
        bound = 1.0 / jnp.sqrt(float(fan_in))
        w = jax.random.uniform(kw, (fan_in, fan_out), jnp.float32, -bound, bound)
        b = jax.random.uniform(kb, (1, fan_out), jnp.float32, -bound, bound)
        return w, b

    keys = jax.random.split(key, 6)
    wv1, bv1 = linear(keys[0], input_size_values, hidden_size)
    wv2, bv2 = linear(keys[1], hidden_size, hidden_size)
    wh1, bh1 = linear(keys[2], input_size_headers, hidden_size)
    wh2, bh2 = linear(keys[3], hidden_size, hidden_size)
    wc1, bc1 = linear(keys[4], hidden_size * 2, hidden_size)
    wc2, bc2 = linear(keys[5], hidden_size, output_size)

    return {
        "wv1": wv1, "bv1": bv1, "wv2": wv2, "bv2": bv2,
        "wh1": wh1, "bh1": bh1, "wh2": wh2, "bh2": bh2,
        "wc1": wc1, "bc1": bc1, "wc2": wc2, "bc2": bc2,
    }


def pack_params(params):
    """Pack canonical params into the kernel operand set: bf16 weights (with
    fc_combined1 split into its two H-row halves so the torch.cat disappears)
    plus one small packed f32 bias array."""
    H = params["wv2"].shape[0]
    O = params["wc2"].shape[1]
    bf16 = jnp.bfloat16

    bw = max(H, O)
    bias = jnp.zeros((8, bw), jnp.float32)
    bias = bias.at[0, :H].set(params["bv1"][0])   # fc_values1
    bias = bias.at[1, :H].set(params["bh1"][0])   # fc_headers1
    bias = bias.at[2, :H].set(params["bv2"][0])   # fc_values2
    bias = bias.at[3, :H].set(params["bh2"][0])   # fc_headers2
    bias = bias.at[4, :H].set(params["bc1"][0])   # fc_combined1
    bias = bias.at[5, :O].set(params["bc2"][0])   # fc_combined2

    return {
        "wv1": params["wv1"].astype(bf16),
        "wv2": params["wv2"].astype(bf16),
        "wh1": params["wh1"].astype(bf16),
        "wh2": params["wh2"].astype(bf16),
        "wc1a": params["wc1"][:H, :].astype(bf16),
        "wc1b": params["wc1"][H:, :].astype(bf16),
        "wc2": params["wc2"].astype(bf16),
        "bias": bias,
    }


def reference_forward(x_values, x_headers, params):
    """Pure-JAX reference with the same precision policy (bf16 matmul operands,
    f32 accumulation / elementwise). Dropout is identity at inference."""
    bf16, f32 = jnp.bfloat16, jnp.float32
    relu = lambda z: jnp.maximum(z, 0.0)
    dot = lambda a, w: jnp.dot(a.astype(bf16), w.astype(bf16), preferred_element_type=f32)

    hv = relu(dot(x_values, params["wv1"]) + params["bv1"])
    hv = relu(dot(hv, params["wv2"]) + params["bv2"])
    hh = relu(dot(x_headers, params["wh1"]) + params["bh1"])
    hh = relu(dot(hh, params["wh2"]) + params["bh2"])
    hc = relu(dot(jnp.concatenate([hv, hh], axis=1), params["wc1"]) + params["bc1"])
    return dot(hc, params["wc2"]) + params["bc2"]


if __name__ == "__main__":
    # small shapes: batch=16, values-embedding=32, headers-embedding=48, hidden=32, out=8
    B = 16
    INPUT_SIZE_VALUES = 32
    INPUT_SIZE_HEADERS = 48
    HIDDEN_SIZE = 32
    OUTPUT_SIZE = 8

    key = jax.random.PRNGKey(0)
    kx, kh, kp = jax.random.split(key, 3)
    x_values = jax.random.normal(kx, (B, INPUT_SIZE_VALUES), jnp.float32)
    x_headers = jax.random.normal(kh, (B, INPUT_SIZE_HEADERS), jnp.float32)

    params = init_params(kp, INPUT_SIZE_VALUES, INPUT_SIZE_HEADERS,
                         HIDDEN_SIZE, OUTPUT_SIZE)
    packed = pack_params(params)

    # single-block path
    out = sentence_transformer_forward(x_values, x_headers, packed)
    out = jax.block_until_ready(out)
    ref = reference_forward(x_values, x_headers, params)
    assert out.shape == (B, OUTPUT_SIZE)
    max_err = float(jnp.max(jnp.abs(out - ref)))
    assert max_err < 2e-2, f"mismatch vs reference (single block), max err={max_err}"

    # multi-step + ragged-last-block path (B=40 -> block_m=32, grid=(2,), masked edge)
    B2 = 40
    kx2, kh2 = jax.random.split(jax.random.PRNGKey(1))
    xv2 = jax.random.normal(kx2, (B2, INPUT_SIZE_VALUES), jnp.float32)
    xh2 = jax.random.normal(kh2, (B2, INPUT_SIZE_HEADERS), jnp.float32)
    out2 = jax.block_until_ready(sentence_transformer_forward(xv2, xh2, packed))
    ref2 = reference_forward(xv2, xh2, params)
    assert out2.shape == (B2, OUTPUT_SIZE)
    max_err2 = float(jnp.max(jnp.abs(out2 - ref2)))
    assert max_err2 < 2e-2, f"mismatch vs reference (ragged), max err={max_err2}"

    print("KERNEL_OK")
</pallas_src>

<mosaic_0001>
module attributes {stable_mosaic.version = 11 : i64} {
  func.func @_mlp_kernel(%arg0: i32, %arg1: memref<16x32xf32, #tpu.memory_space<vmem>>, %arg2: memref<16x48xf32, #tpu.memory_space<vmem>>, %arg3: memref<32x32xbf16, #tpu.memory_space<vmem>>, %arg4: memref<32x32xbf16, #tpu.memory_space<vmem>>, %arg5: memref<48x32xbf16, #tpu.memory_space<vmem>>, %arg6: memref<32x32xbf16, #tpu.memory_space<vmem>>, %arg7: memref<32x32xbf16, #tpu.memory_space<vmem>>, %arg8: memref<32x32xbf16, #tpu.memory_space<vmem>>, %arg9: memref<32x8xbf16, #tpu.memory_space<vmem>>, %arg10: memref<8x32xf32, #tpu.memory_space<vmem>>, %arg11: memref<16x8xf32, #tpu.memory_space<vmem>>) attributes {dimension_semantics = [#tpu.dimension_semantics<parallel>], iteration_bounds = array<i64: 1>, scalar_prefetch = 0 : i64, scratch_operands = 0 : i64, tpu.core_type = #tpu.core_type<tc>, window_params = [{transform_indices = @transform_0, window_bounds = array<i64: 16, 32>}, {transform_indices = @transform_1, window_bounds = array<i64: 16, 48>}, {pipeline_mode = #tpu.pipeline_mode<synchronous>, transform_indices = @transform_2, window_bounds = array<i64: 32, 32>}, {pipeline_mode = #tpu.pipeline_mode<synchronous>, transform_indices = @transform_3, window_bounds = array<i64: 32, 32>}, {pipeline_mode = #tpu.pipeline_mode<synchronous>, transform_indices = @transform_4, window_bounds = array<i64: 48, 32>}, {pipeline_mode = #tpu.pipeline_mode<synchronous>, transform_indices = @transform_5, window_bounds = array<i64: 32, 32>}, {pipeline_mode = #tpu.pipeline_mode<synchronous>, transform_indices = @transform_6, window_bounds = array<i64: 32, 32>}, {pipeline_mode = #tpu.pipeline_mode<synchronous>, transform_indices = @transform_7, window_bounds = array<i64: 32, 32>}, {pipeline_mode = #tpu.pipeline_mode<synchronous>, transform_indices = @transform_8, window_bounds = array<i64: 32, 8>}, {pipeline_mode = #tpu.pipeline_mode<synchronous>, transform_indices = @transform_9, window_bounds = array<i64: 8, 32>}, {transform_indices = @transform_10, window_bounds = array<i64: 16, 8>}]} {
    %c0 = arith.constant 0 : index
    %c0_0 = arith.constant 0 : index
    %0 = vector.load %arg1[%c0, %c0_0] : memref<16x32xf32, #tpu.memory_space<vmem>>, vector<16x32xf32>
    %1 = arith.truncf %0 : vector<16x32xf32> to vector<16x32xbf16>
    %c0_1 = arith.constant 0 : index
    %c0_2 = arith.constant 0 : index
    %2 = vector.load %arg2[%c0_1, %c0_2] : memref<16x48xf32, #tpu.memory_space<vmem>>, vector<16x48xf32>
    %3 = arith.truncf %2 : vector<16x48xf32> to vector<16x48xbf16>
    %c0_3 = arith.constant 0 : index
    %c0_4 = arith.constant 0 : index
    %4 = vector.load %arg3[%c0_3, %c0_4] : memref<32x32xbf16, #tpu.memory_space<vmem>>, vector<32x32xbf16>
    %cst = arith.constant dense<0.000000e+00> : vector<16x32xf32>
    %5 = tpu.matmul %1, %4, %cst {dimension_numbers = #tpu.dot_dimension_numbers<[1], [0], [0], [1], [0, 0, 1, 1], [], []>} : vector<16x32xbf16>, vector<32x32xbf16>, vector<16x32xf32> -> vector<16x32xf32>
    %c0_5 = arith.constant 0 : index
    %c0_6 = arith.constant 0 : index
    %6 = vector.load %arg10[%c0_5, %c0_6] : memref<8x32xf32, #tpu.memory_space<vmem>>, vector<1x32xf32>
    %7 = vector.broadcast %6 : vector<1x32xf32> to vector<16x32xf32>
    %8 = arith.addf %5, %7 : vector<16x32xf32>
    %cst_7 = arith.constant 0.000000e+00 : f32
    %9 = vector.broadcast %cst_7 : f32 to vector<16x32xf32>
    %10 = arith.maximumf %8, %9 : vector<16x32xf32>
    %11 = arith.truncf %10 : vector<16x32xf32> to vector<16x32xbf16>
    %c0_8 = arith.constant 0 : index
    %c0_9 = arith.constant 0 : index
    %12 = vector.load %arg4[%c0_8, %c0_9] : memref<32x32xbf16, #tpu.memory_space<vmem>>, vector<32x32xbf16>
    %cst_10 = arith.constant dense<0.000000e+00> : vector<16x32xf32>
    %13 = tpu.matmul %11, %12, %cst_10 {dimension_numbers = #tpu.dot_dimension_numbers<[1], [0], [0], [1], [0, 0, 1, 1], [], []>} : vector<16x32xbf16>, vector<32x32xbf16>, vector<16x32xf32> -> vector<16x32xf32>
    %c2 = arith.constant 2 : index
    %c0_11 = arith.constant 0 : index
    %14 = vector.load %arg10[%c2, %c0_11] : memref<8x32xf32, #tpu.memory_space<vmem>>, vector<1x32xf32>
    %15 = vector.broadcast %14 : vector<1x32xf32> to vector<16x32xf32>
    %16 = arith.addf %13, %15 : vector<16x32xf32>
    %cst_12 = arith.constant 0.000000e+00 : f32
    %17 = vector.broadcast %cst_12 : f32 to vector<16x32xf32>
    %18 = arith.maximumf %16, %17 : vector<16x32xf32>
    %c0_13 = arith.constant 0 : index
    %c0_14 = arith.constant 0 : index
    %19 = vector.load %arg5[%c0_13, %c0_14] : memref<48x32xbf16, #tpu.memory_space<vmem>>, vector<48x32xbf16>
    %cst_15 = arith.constant dense<0.000000e+00> : vector<16x32xf32>
    %20 = tpu.matmul %3, %19, %cst_15 {dimension_numbers = #tpu.dot_dimension_numbers<[1], [0], [0], [1], [0, 0, 1, 1], [], []>} : vector<16x48xbf16>, vector<48x32xbf16>, vector<16x32xf32> -> vector<16x32xf32>
    %c1 = arith.constant 1 : index
    %c0_16 = arith.constant 0 : index
    %21 = vector.load %arg10[%c1, %c0_16] : memref<8x32xf32, #tpu.memory_space<vmem>>, vector<1x32xf32>
    %22 = vector.broadcast %21 : vector<1x32xf32> to vector<16x32xf32>
    %23 = arith.addf %20, %22 : vector<16x32xf32>
    %cst_17 = arith.constant 0.000000e+00 : f32
    %24 = vector.broadcast %cst_17 : f32 to vector<16x32xf32>
    %25 = arith.maximumf %23, %24 : vector<16x32xf32>
    %26 = arith.truncf %25 : vector<16x32xf32> to vector<16x32xbf16>
    %c0_18 = arith.constant 0 : index
    %c0_19 = arith.constant 0 : index
    %27 = vector.load %arg6[%c0_18, %c0_19] : memref<32x32xbf16, #tpu.memory_space<vmem>>, vector<32x32xbf16>
    %cst_20 = arith.constant dense<0.000000e+00> : vector<16x32xf32>
    %28 = tpu.matmul %26, %27, %cst_20 {dimension_numbers = #tpu.dot_dimension_numbers<[1], [0], [0], [1], [0, 0, 1, 1], [], []>} : vector<16x32xbf16>, vector<32x32xbf16>, vector<16x32xf32> -> vector<16x32xf32>
    %c3 = arith.constant 3 : index
    %c0_21 = arith.constant 0 : index
    %29 = vector.load %arg10[%c3, %c0_21] : memref<8x32xf32, #tpu.memory_space<vmem>>, vector<1x32xf32>
    %30 = vector.broadcast %29 : vector<1x32xf32> to vector<16x32xf32>
    %31 = arith.addf %28, %30 : vector<16x32xf32>
    %cst_22 = arith.constant 0.000000e+00 : f32
    %32 = vector.broadcast %cst_22 : f32 to vector<16x32xf32>
    %33 = arith.maximumf %31, %32 : vector<16x32xf32>
    %34 = arith.truncf %18 : vector<16x32xf32> to vector<16x32xbf16>
    %c0_23 = arith.constant 0 : index
    %c0_24 = arith.constant 0 : index
    %35 = vector.load %arg7[%c0_23, %c0_24] : memref<32x32xbf16, #tpu.memory_space<vmem>>, vector<32x32xbf16>
    %cst_25 = arith.constant dense<0.000000e+00> : vector<16x32xf32>
    %36 = tpu.matmul %34, %35, %cst_25 {dimension_numbers = #tpu.dot_dimension_numbers<[1], [0], [0], [1], [0, 0, 1, 1], [], []>} : vector<16x32xbf16>, vector<32x32xbf16>, vector<16x32xf32> -> vector<16x32xf32>
    %37 = arith.truncf %33 : vector<16x32xf32> to vector<16x32xbf16>
    %c0_26 = arith.constant 0 : index
    %c0_27 = arith.constant 0 : index
    %38 = vector.load %arg8[%c0_26, %c0_27] : memref<32x32xbf16, #tpu.memory_space<vmem>>, vector<32x32xbf16>
    %cst_28 = arith.constant dense<0.000000e+00> : vector<16x32xf32>
    %39 = tpu.matmul %37, %38, %cst_28 {dimension_numbers = #tpu.dot_dimension_numbers<[1], [0], [0], [1], [0, 0, 1, 1], [], []>} : vector<16x32xbf16>, vector<32x32xbf16>, vector<16x32xf32> -> vector<16x32xf32>
    %40 = arith.addf %36, %39 : vector<16x32xf32>
    %c4 = arith.constant 4 : index
    %c0_29 = arith.constant 0 : index
    %41 = vector.load %arg10[%c4, %c0_29] : memref<8x32xf32, #tpu.memory_space<vmem>>, vector<1x32xf32>
    %42 = vector.broadcast %41 : vector<1x32xf32> to vector<16x32xf32>
    %43 = arith.addf %40, %42 : vector<16x32xf32>
    %cst_30 = arith.constant 0.000000e+00 : f32
    %44 = vector.broadcast %cst_30 : f32 to vector<16x32xf32>
    %45 = arith.maximumf %43, %44 : vector<16x32xf32>
    %46 = arith.truncf %45 : vector<16x32xf32> to vector<16x32xbf16>
    %c0_31 = arith.constant 0 : index
    %c0_32 = arith.constant 0 : index
    %47 = vector.load %arg9[%c0_31, %c0_32] : memref<32x8xbf16, #tpu.memory_space<vmem>>, vector<32x8xbf16>
    %cst_33 = arith.constant dense<0.000000e+00> : vector<16x8xf32>
    %48 = tpu.matmul %46, %47, %cst_33 {dimension_numbers = #tpu.dot_dimension_numbers<[1], [0], [0], [1], [0, 0, 1, 1], [], []>} : vector<16x32xbf16>, vector<32x8xbf16>, vector<16x8xf32> -> vector<16x8xf32>
    %c5 = arith.constant 5 : index
    %c0_34 = arith.constant 0 : index
    %49 = vector.load %arg10[%c5, %c0_34] : memref<8x32xf32, #tpu.memory_space<vmem>>, vector<1x8xf32>
    %50 = vector.broadcast %49 : vector<1x8xf32> to vector<16x8xf32>
    %51 = arith.addf %48, %50 : vector<16x8xf32>
    %c0_35 = arith.constant 0 : index
    %c0_36 = arith.constant 0 : index
    %52 = vector.load %arg11[%c0_35, %c0_36] : memref<16x8xf32, #tpu.memory_space<vmem>>, vector<16x8xf32>
    tpu.vector_store %arg11[%c0_35, %c0_36], %51 {strides = array<i32>} : memref<16x8xf32, #tpu.memory_space<vmem>>, vector<16x8xf32>,
    return
  }
  func.func @transform_0(%arg0: i32) -> (i32, i32) {
    %c0_i32 = arith.constant 0 : i32
    %c0_i32_0 = arith.constant 0 : i32
    return %arg0, %c0_i32 : i32, i32
  }
  func.func @transform_1(%arg0: i32) -> (i32, i32) {
    %c0_i32 = arith.constant 0 : i32
    %c0_i32_0 = arith.constant 0 : i32
    return %arg0, %c0_i32 : i32, i32
  }
  func.func @transform_2(%arg0: i32) -> (i32, i32) {
    %c0_i32 = arith.constant 0 : i32
    %c0_i32_0 = arith.constant 0 : i32
    %c0_i32_1 = arith.constant 0 : i32
    return %c0_i32, %c0_i32_0 : i32, i32
  }
  func.func @transform_3(%arg0: i32) -> (i32, i32) {
    %c0_i32 = arith.constant 0 : i32
    %c0_i32_0 = arith.constant 0 : i32
    %c0_i32_1 = arith.constant 0 : i32
    return %c0_i32, %c0_i32_0 : i32, i32
  }
  func.func @transform_4(%arg0: i32) -> (i32, i32) {
    %c0_i32 = arith.constant 0 : i32
    %c0_i32_0 = arith.constant 0 : i32
    %c0_i32_1 = arith.constant 0 : i32
    return %c0_i32, %c0_i32_0 : i32, i32
  }
  func.func @transform_5(%arg0: i32) -> (i32, i32) {
    %c0_i32 = arith.constant 0 : i32
    %c0_i32_0 = arith.constant 0 : i32
    %c0_i32_1 = arith.constant 0 : i32
    return %c0_i32, %c0_i32_0 : i32, i32
  }
  func.func @transform_6(%arg0: i32) -> (i32, i32) {
    %c0_i32 = arith.constant 0 : i32
    %c0_i32_0 = arith.constant 0 : i32
    %c0_i32_1 = arith.constant 0 : i32
    return %c0_i32, %c0_i32_0 : i32, i32
  }
  func.func @transform_7(%arg0: i32) -> (i32, i32) {
    %c0_i32 = arith.constant 0 : i32
    %c0_i32_0 = arith.constant 0 : i32
    %c0_i32_1 = arith.constant 0 : i32
    return %c0_i32, %c0_i32_0 : i32, i32
  }
  func.func @transform_8(%arg0: i32) -> (i32, i32) {
    %c0_i32 = arith.constant 0 : i32
    %c0_i32_0 = arith.constant 0 : i32
    %c0_i32_1 = arith.constant 0 : i32
    return %c0_i32, %c0_i32_0 : i32, i32
  }
  func.func @transform_9(%arg0: i32) -> (i32, i32) {
    %c0_i32 = arith.constant 0 : i32
    %c0_i32_0 = arith.constant 0 : i32
    %c0_i32_1 = arith.constant 0 : i32
    return %c0_i32, %c0_i32_0 : i32, i32
  }
  func.func @transform_10(%arg0: i32) -> (i32, i32) {
    %c0_i32 = arith.constant 0 : i32
    %c0_i32_0 = arith.constant 0 : i32
    return %arg0, %c0_i32 : i32, i32
  }
}

</mosaic_0001>

<llo_original>
// kernel: sentence_transformer_forward.1
$region0: #{sentence_transformer_forward.1}
  #allocation0 [shape = 'u32[]', space=smem, size = 0x4, offset = 0x4, fixed_abs, tag = 'smem constant byte address 0x4 - core index']
  #allocation1 [shape = 'u32[144,128]{1,0:T(1,128)}', space=vmem, size = 0x12000, scoped, tag = 'internal scratch']
  %s0 = inlined_call_operand.vmem [shape: f32[16,32], index: 0, kind: input, shape index: {}]
  %s1 = inlined_call_operand.vmem [shape: f32[16,48], index: 1, kind: input, shape index: {}]
  %s2 = inlined_call_operand.vmem [shape: bf16[32,32], index: 2, kind: input, shape index: {}]
  %s3 = inlined_call_operand.vmem [shape: bf16[32,32], index: 3, kind: input, shape index: {}]
  %s4 = inlined_call_operand.vmem [shape: bf16[48,32], index: 4, kind: input, shape index: {}]
  %s5 = inlined_call_operand.hbm [shape: bf16[32,32], index: 5, kind: input, shape index: {}]
  %s6 = inlined_call_operand.hbm [shape: bf16[32,32], index: 6, kind: input, shape index: {}]
  %s7 = inlined_call_operand.hbm [shape: bf16[32,32], index: 7, kind: input, shape index: {}]
  %s8 = inlined_call_operand.vmem [shape: bf16[32,8], index: 8, kind: input, shape index: {}]
  %s9 = inlined_call_operand.hbm [shape: f32[8,32], index: 9, kind: input, shape index: {}]
  %s10 = inlined_call_operand.vmem [shape: f32[16,8], index: 10, kind: output, shape index: {}]
  %s11 = sld [smem:[#allocation0]]
  $region66: #{sentence_transformer_forward.1} parent=0
    _
  %s13 = ssub.s32 1, %s11
  %s14 = scalar_select 0, %s13, %s11
  $region1: #{sentence_transformer_forward.1} parent=0
    #allocation2 [shape = 'u8[8192]{0}', space=vmem, size = 0x2000, scoped, tag = 'input window, operand 5, single buffered']
    #allocation3 [shape = 's32[1]{0}', space=sflag, size = 0x4, scoped, tag = 'scoped memory for sentence_transformer_forward.1']
    #allocation4 [shape = 'u8[8192]{0}', space=vmem, size = 0x2000, scoped, tag = 'input window, operand 6, single buffered']
    #allocation5 [shape = 's32[1]{0}', space=sflag, size = 0x4, scoped, tag = 'scoped memory for sentence_transformer_forward.1']
    #allocation6 [shape = 'u8[8192]{0}', space=vmem, size = 0x2000, scoped, tag = 'input window, operand 7, single buffered']
    #allocation7 [shape = 'u8[4096]{0}', space=vmem, size = 0x1000, scoped, tag = 'input window, operand 9, single buffered']
    #allocation8 [shape = 's32[1]{0}', space=sflag, size = 0x4, scoped, tag = 'scoped memory for sentence_transformer_forward.1']
    %15 = vsyncpa [#allocation3], 0
    %16 = vsyncpa [#allocation5], 0
    %17 = vsyncpa [#allocation8], 0
    // Predicated region
    $region2: #{sentence_transformer_forward.1} parent=1 // pred_check
      _
    $region3: #{sentence_transformer_forward.1} parent=1 // pred_check_branch
      %19 = sbr.rel (0) target = $region5
    $region4: #{sentence_transformer_forward.1} parent=1 // pred_region
      _
    $region5: #{sentence_transformer_forward.1} parent=1 // pred_fallthru
      _
    // Predicated region
    $region6: #{sentence_transformer_forward.1} parent=1 // pred_check
      _
    $region7: #{sentence_transformer_forward.1} parent=1 // pred_check_branch
      %21 = sbr.rel (0) target = $region9
    $region8: #{sentence_transformer_forward.1} parent=1 // pred_region
      _
    $region9: #{sentence_transformer_forward.1} parent=1 // pred_fallthru
      _
    // Predicated region
    $region10: #{sentence_transformer_forward.1} parent=1 // pred_check
      _
    $region11: #{sentence_transformer_forward.1} parent=1 // pred_check_branch
      %23 = sbr.rel (0) target = $region13
    $region12: #{sentence_transformer_forward.1} parent=1 // pred_region
      _
    $region13: #{sentence_transformer_forward.1} parent=1 // pred_fallthru
      _
    // Predicated region
    $region14: #{sentence_transformer_forward.1} parent=1 // pred_check
      _
    $region15: #{sentence_transformer_forward.1} parent=1 // pred_check_branch
      %25 = sbr.rel (0) target = $region17
    $region16: #{sentence_transformer_forward.1} parent=1 // pred_region
      _
    $region17: #{sentence_transformer_forward.1} parent=1 // pred_fallthru
      _
    // Predicated region
    $region18: #{sentence_transformer_forward.1} parent=1 // pred_check
      _
    $region19: #{sentence_transformer_forward.1} parent=1 // pred_check_branch
      %27 = sbr.rel (0) target = $region21
    $region20: #{sentence_transformer_forward.1} parent=1 // pred_region
      _
    $region21: #{sentence_transformer_forward.1} parent=1 // pred_fallthru
      _
    // Predicated region
    $region22: #{sentence_transformer_forward.1} parent=1 // pred_check
      _
    $region23: #{sentence_transformer_forward.1} parent=1 // pred_check_branch
      %29 = sbr.rel (0) target = $region25
    $region24: #{sentence_transformer_forward.1} parent=1 // pred_region
      %s31 = ssub.s32 256, 256
      %32 = vsyncadd [#allocation3], %s31
      %s33 = sshll.u32 [#allocation2], 4
      %s34 = int_to_ptr.vmem [resolvable:$true] %s33
      %39 = dma.hbm_to_vmem [thread:$0]  %s5, 256, %s34, [#allocation3], 64, 64, 4
    $region25: #{sentence_transformer_forward.1} parent=1 // pred_fallthru
      _
    // Predicated region
    $region26: #{sentence_transformer_forward.1} parent=1 // pred_check
      _
    $region27: #{sentence_transformer_forward.1} parent=1 // pred_check_branch
      %41 = sbr.rel (0) target = $region29
    $region28: #{sentence_transformer_forward.1} parent=1 // pred_region
      %s43 = ssub.s32 256, 256
      %44 = vsyncadd [#allocation5], %s43
      %s45 = sshll.u32 [#allocation4], 4
      %s46 = int_to_ptr.vmem [resolvable:$true] %s45
      %51 = dma.hbm_to_vmem [thread:$0]  %s6, 256, %s46, [#allocation5], 64, 64, 4
    $region29: #{sentence_transformer_forward.1} parent=1 // pred_fallthru
      _
    // Predicated region
    $region30: #{sentence_transformer_forward.1} parent=1 // pred_check
      _
    $region31: #{sentence_transformer_forward.1} parent=1 // pred_check_branch
      %53 = sbr.rel (0) target = $region33
    $region32: #{sentence_transformer_forward.1} parent=1 // pred_region
      %s55 = ssub.s32 256, 256
      %56 = vsyncadd [#allocation5], %s55
      %s57 = sshll.u32 [#allocation6], 4
      %s58 = int_to_ptr.vmem [resolvable:$true] %s57
      %63 = dma.hbm_to_vmem [thread:$0]  %s7, 256, %s58, [#allocation5], 64, 64, 4
    $region33: #{sentence_transformer_forward.1} parent=1 // pred_fallthru
      _
    // Predicated region
    $region34: #{sentence_transformer_forward.1} parent=1 // pred_check
      _
    $region35: #{sentence_transformer_forward.1} parent=1 // pred_check_branch
      %65 = sbr.rel (0) target = $region37
    $region36: #{sentence_transformer_forward.1} parent=1 // pred_region
      _
    $region37: #{sentence_transformer_forward.1} parent=1 // pred_fallthru
      _
    // Predicated region
    $region38: #{sentence_transformer_forward.1} parent=1 // pred_check
      _
    $region39: #{sentence_transformer_forward.1} parent=1 // pred_check_branch
      %67 = sbr.rel (0) target = $region41
    $region40: #{sentence_transformer_forward.1} parent=1 // pred_region
      %s69 = ssub.s32 128, 128
      %70 = vsyncadd [#allocation8], %s69
      %s72 = sshll.u32 [#allocation7], 4
      %s73 = int_to_ptr.vmem [resolvable:$true] %s72
      %75 = dma.hbm_to_vmem [thread:$0]  %s9, 128, %s73, [#allocation8]
    $region41: #{sentence_transformer_forward.1} parent=1 // pred_fallthru
      _
    // Predicated region
    $region42: #{sentence_transformer_forward.1} parent=1 // pred_check
      _
    $region43: #{sentence_transformer_forward.1} parent=1 // pred_check_branch
      %77 = sbr.rel (0) target = $region45
    $region44: #{sentence_transformer_forward.1} parent=1 // pred_region
      %78 = dma.done [#allocation3], 256
    $region45: #{sentence_transformer_forward.1} parent=1 // pred_fallthru
      _
    // Predicated region
    $region46: #{sentence_transformer_forward.1} parent=1 // pred_check
      _
    $region47: #{sentence_transformer_forward.1} parent=1 // pred_check_branch
      %80 = sbr.rel (0) target = $region49
    $region48: #{sentence_transformer_forward.1} parent=1 // pred_region
      %81 = dma.done [#allocation5], 256
    $region49: #{sentence_transformer_forward.1} parent=1 // pred_fallthru
      _
    // Predicated region
    $region50: #{sentence_transformer_forward.1} parent=1 // pred_check
      _
    $region51: #{sentence_transformer_forward.1} parent=1 // pred_check_branch
      %83 = sbr.rel (0) target = $region53
    $region52: #{sentence_transformer_forward.1} parent=1 // pred_region
      %84 = dma.done [#allocation5], 256
    $region53: #{sentence_transformer_forward.1} parent=1 // pred_fallthru
      _
    // Predicated region
    $region54: #{sentence_transformer_forward.1} parent=1 // pred_check
      _
    $region55: #{sentence_transformer_forward.1} parent=1 // pred_check_branch
      %86 = sbr.rel (0) target = $region57
    $region56: #{sentence_transformer_forward.1} parent=1 // pred_region
      %87 = dma.done [#allocation8], 128
    $region57: #{sentence_transformer_forward.1} parent=1 // pred_fallthru
      _
    %v89 = vld [vmem:[%s0] sm:$0xff]
    %v90 = vld [vmem:[%s0 + $0x8] sm:$0xff]
    %v91 = vpack.c.bf16 %v90, %v89
    %v92 = vld [vmem:[%s1] sm:$0xff]
    %v93 = vld [vmem:[%s1 + $0x8] sm:$0xff]
    %v94 = vpack.c.bf16 %v93, %v92
    %v95 = vld [vmem:[%s2] sm:$0xf]
    %v96 = vld [vmem:[%s2 + $0x4] sm:$0xf]
    %v97 = vld [vmem:[%s2 + $0x8] sm:$0xf]
    %v98 = vld [vmem:[%s2 + $0xc] sm:$0xf]
    %v99 = vld [vmem:[#allocation7] sm:$0x1]
    %v100 = vlaneseq
    %v101 = vshrl.u32 %v100, 7
    %v102 = vsub.s32 0, %v101
    %v103 = vrot.slane %v99, %v102
    %v108 = vunpack.c.l.b16 %v95
    %v109 = vunpack.c.l.b16 %v96
    %v110 = vunpack.c.l.b16 %v97
    %v111 = vunpack.c.l.b16 %v98
    %v112 = vpack.c.b16 %v109, %v108
    %v113 = vpack.c.b16 %v111, %v110
    %vm116 = vcmask 261120
    %v118 = vsel %vm116, %v91, 0
    %120 = vmatprep.subr.bf16.mxu0 0
    %121 = vmatpush1.bf16.msra.mxu0 %v112
    %122 = vmatprep.subr.bf16.mxu0 0
    %123 = vmatpush1.bf16.msra.mxu0 %v113
    %124 = vmatprep.subr.bf16.mxu0 0
    %125 = vmatpush1.bf16.msra.mxu0 0
    %126 = vmatprep.subr.bf16.mxu0 0
    %127 = vmatpush1.bf16.msra.mxu0 0
    %128 = vmatprep.subr.bf16.mxu0 0
    %129 = vmatpush1.bf16.msra.mxu0 0
    %130 = vmatprep.subr.bf16.mxu0 0
    %131 = vmatpush1.bf16.msra.mxu0 0
    %132 = vmatprep.subr.bf16.mxu0 0
    %133 = vmatpush1.bf16.msra.mxu0 0
    %134 = vmatprep.subr.bf16.mxu0 0
    %135 = vmatpush1.bf16.msra.mxu0 0
    %136 = vmatprep.subr.bf16.mxu0 0
    %137 = vmatpush1.bf16.msra.mxu0 0
    %138 = vmatprep.subr.bf16.mxu0 0
    %139 = vmatpush1.bf16.msra.mxu0 0
    %140 = vmatprep.subr.bf16.mxu0 0
    %141 = vmatpush1.bf16.msra.mxu0 0
    %142 = vmatprep.subr.bf16.mxu0 0
    %143 = vmatpush1.bf16.msra.mxu0 0
    %144 = vmatprep.subr.bf16.mxu0 0
    %145 = vmatpush1.bf16.msra.mxu0 0
    %146 = vmatprep.subr.bf16.mxu0 0
    %147 = vmatpush1.bf16.msra.mxu0 0
    %148 = vmatprep.subr.bf16.mxu0 0
    %149 = vmatpush1.bf16.msra.mxu0 0
    %150 = vmatprep.subr.bf16.mxu0 0
    %151 = vmatpush1.bf16.msra.mxu0 0
    %152 = vmatprep.mubr.bf16.mxu0 0
    %153 = vmatmul.mubr.bf16.gmra.mrb[0].mxu0 %v118
    %v154 = vpop.f32.mrb[0].mxu0
    %v155 = vadd.f32 %v103, %v154
    %v156 = vpop.f32.mrb[0].mxu0
    %v157 = vpop.f32.mrb[0].mxu0
    %v158 = vadd.f32 %v103, %v157
    %v159 = vpop.f32.mrb[0].mxu0
    %160 = vdwg.mxu0
    %v161 = vmax.f32 %v155, 0.0
    %v162 = vmax.f32 %v158, 0.0
    %v163 = vpack.c.bf16 %v162, %v161
    %v164 = vld [vmem:[%s3] sm:$0xf]
    %v165 = vld [vmem:[%s3 + $0x4] sm:$0xf]
    %v166 = vld [vmem:[%s3 + $0x8] sm:$0xf]
    %v167 = vld [vmem:[%s3 + $0xc] sm:$0xf]
    %v168 = vld [vmem:[#allocation7 + $0x2] sm:$0x1]
    %v169 = vlaneseq
    %v170 = vshrl.u32 %v169, 7
    %v171 = vsub.s32 0, %v170
    %v172 = vrot.slane %v168, %v171
    %v177 = vunpack.c.l.b16 %v164
    %v178 = vunpack.c.l.b16 %v165
    %v179 = vunpack.c.l.b16 %v166
    %v180 = vunpack.c.l.b16 %v167
    %v181 = vpack.c.b16 %v178, %v177
    %v182 = vpack.c.b16 %v180, %v179
    %v186 = vsel %vm116, %v163, 0
    %188 = vmatprep.subr.bf16.mxu0 0
    %189 = vmatpush1.bf16.msra.mxu0 %v181
    %190 = vmatprep.subr.bf16.mxu0 0
    %191 = vmatpush1.bf16.msra.mxu0 %v182
    %192 = vmatprep.subr.bf16.mxu0 0
    %193 = vmatpush1.bf16.msra.mxu0 0
    %194 = vmatprep.subr.bf16.mxu0 0
    %195 = vmatpush1.bf16.msra.mxu0 0
    %196 = vmatprep.subr.bf16.mxu0 0
    %197 = vmatpush1.bf16.msra.mxu0 0
    %198 = vmatprep.subr.bf16.mxu0 0
    %199 = vmatpush1.bf16.msra.mxu0 0
    %200 = vmatprep.subr.bf16.mxu0 0
    %201 = vmatpush1.bf16.msra.mxu0 0
    %202 = vmatprep.subr.bf16.mxu0 0
    %203 = vmatpush1.bf16.msra.mxu0 0
    %204 = vmatprep.subr.bf16.mxu0 0
    %205 = vmatpush1.bf16.msra.mxu0 0
    %206 = vmatprep.subr.bf16.mxu0 0
    %207 = vmatpush1.bf16.msra.mxu0 0
    %208 = vmatprep.subr.bf16.mxu0 0
    %209 = vmatpush1.bf16.msra.mxu0 0
    %210 = vmatprep.subr.bf16.mxu0 0
    %211 = vmatpush1.bf16.msra.mxu0 0
    %212 = vmatprep.subr.bf16.mxu0 0
    %213 = vmatpush1.bf16.msra.mxu0 0
    %214 = vmatprep.subr.bf16.mxu0 0
    %215 = vmatpush1.bf16.msra.mxu0 0
    %216 = vmatprep.subr.bf16.mxu0 0
    %217 = vmatpush1.bf16.msra.mxu0 0
    %218 = vmatprep.subr.bf16.mxu0 0
    %219 = vmatpush1.bf16.msra.mxu0 0
    %220 = vmatprep.mubr.bf16.mxu0 0
    %221 = vmatmul.mubr.bf16.gmra.mrb[0].mxu0 %v186
    %v222 = vpop.f32.mrb[0].mxu0
    %v223 = vadd.f32 %v172, %v222
    %v224 = vpop.f32.mrb[0].mxu0
    %v225 = vpop.f32.mrb[0].mxu0
    %v226 = vadd.f32 %v172, %v225
    %v227 = vpop.f32.mrb[0].mxu0
    %228 = vdwg.mxu0
    %v229 = vmax.f32 %v223, 0.0
    %v230 = vmax.f32 %v226, 0.0
    %v231 = vld [vmem:[%s4] sm:$0xf]
    %v232 = vld [vmem:[%s4 + $0x4] sm:$0xf]
    %v233 = vld [vmem:[%s4 + $0x8] sm:$0xf]
    %v234 = vld [vmem:[%s4 + $0xc] sm:$0xf]
    %v235 = vld [vmem:[%s4 + $0x10] sm:$0xf]
    %v236 = vld [vmem:[%s4 + $0x14] sm:$0xf]
    %v237 = vld [vmem:[#allocation7 + $0x1] sm:$0x1]
    %v238 = vlaneseq
    %v239 = vshrl.u32 %v238, 7
    %v240 = vsub.s32 0, %v239
    %v241 = vrot.slane %v237, %v240
    %v248 = vunpack.c.l.b16 %v231
    %v249 = vunpack.c.l.b16 %v232
    %v250 = vunpack.c.l.b16 %v233
    %v251 = vunpack.c.l.b16 %v234
    %v252 = vunpack.c.l.b16 %v235
    %v253 = vunpack.c.l.b16 %v236
    %v254 = vpack.c.b16 %v249, %v248
    %v255 = vpack.c.b16 %v251, %v250
    %v256 = vpack.c.b16 %v253, %v252
    %vm260 = vcmask 392192
    %v262 = vsel %vm260, %v94, 0
    %264 = vmatprep.subr.bf16.mxu0 0
    %265 = vmatpush1.bf16.msra.mxu0 %v254
    %266 = vmatprep.subr.bf16.mxu0 0
    %267 = vmatpush1.bf16.msra.mxu0 %v255
    %268 = vmatprep.subr.bf16.mxu0 0
    %269 = vmatpush1.bf16.msra.mxu0 %v256
    %270 = vmatprep.subr.bf16.mxu0 0
    %271 = vmatpush1.bf16.msra.mxu0 0
    %272 = vmatprep.subr.bf16.mxu0 0
    %273 = vmatpush1.bf16.msra.mxu0 0
    %274 = vmatprep.subr.bf16.mxu0 0
    %275 = vmatpush1.bf16.msra.mxu0 0
    %276 = vmatprep.subr.bf16.mxu0 0
    %277 = vmatpush1.bf16.msra.mxu0 0
    %278 = vmatprep.subr.bf16.mxu0 0
    %279 = vmatpush1.bf16.msra.mxu0 0
    %280 = vmatprep.subr.bf16.mxu0 0
    %281 = vmatpush1.bf16.msra.mxu0 0
    %282 = vmatprep.subr.bf16.mxu0 0
    %283 = vmatpush1.bf16.msra.mxu0 0
    %284 = vmatprep.subr.bf16.mxu0 0
    %285 = vmatpush1.bf16.msra.mxu0 0
    %286 = vmatprep.subr.bf16.mxu0 0
    %287 = vmatpush1.bf16.msra.mxu0 0
    %288 = vmatprep.subr.bf16.mxu0 0
    %289 = vmatpush1.bf16.msra.mxu0 0
    %290 = vmatprep.subr.bf16.mxu0 0
    %291 = vmatpush1.bf16.msra.mxu0 0
    %292 = vmatprep.subr.bf16.mxu0 0
    %293 = vmatpush1.bf16.msra.mxu0 0
    %294 = vmatprep.subr.bf16.mxu0 0
    %295 = vmatpush1.bf16.msra.mxu0 0
    %296 = vmatprep.mubr.bf16.mxu0 0
    %297 = vmatmul.mubr.bf16.gmra.mrb[0].mxu0 %v262
    %v298 = vpop.f32.mrb[0].mxu0
    %v299 = vadd.f32 %v241, %v298
    %v300 = vpop.f32.mrb[0].mxu0
    %v301 = vpop.f32.mrb[0].mxu0
    %v302 = vadd.f32 %v241, %v301
    %v303 = vpop.f32.mrb[0].mxu0
    %304 = vdwg.mxu0
    %v305 = vmax.f32 %v299, 0.0
    %v306 = vmax.f32 %v302, 0.0
    %v307 = vpack.c.bf16 %v306, %v305
    %v308 = vld [vmem:[#allocation2] sm:$0xf]
    %v309 = vld [vmem:[#allocation2 + $0x4] sm:$0xf]
    %v310 = vld [vmem:[#allocation2 + $0x8] sm:$0xf]
    %v311 = vld [vmem:[#allocation2 + $0xc] sm:$0xf]
    %v312 = vld [vmem:[#allocation7 + $0x3] sm:$0x1]
    %v313 = vlaneseq
    %v314 = vshrl.u32 %v313, 7
    %v315 = vsub.s32 0, %v314
    %v316 = vrot.slane %v312, %v315
    %v321 = vunpack.c.l.b16 %v308
    %v322 = vunpack.c.l.b16 %v309
    %v323 = vunpack.c.l.b16 %v310
    %v324 = vunpack.c.l.b16 %v311
    %v325 = vpack.c.b16 %v322, %v321
    %v326 = vpack.c.b16 %v324, %v323
    %v330 = vsel %vm116, %v307, 0
    %332 = vmatprep.subr.bf16.mxu0 0
    %333 = vmatpush1.bf16.msra.mxu0 %v325
    %334 = vmatprep.subr.bf16.mxu0 0
    %335 = vmatpush1.bf16.msra.mxu0 %v326
    %336 = vmatprep.subr.bf16.mxu0 0
    %337 = vmatpush1.bf16.msra.mxu0 0
    %338 = vmatprep.subr.bf16.mxu0 0
    %339 = vmatpush1.bf16.msra.mxu0 0
    %340 = vmatprep.subr.bf16.mxu0 0
    %341 = vmatpush1.bf16.msra.mxu0 0
    %342 = vmatprep.subr.bf16.mxu0 0
    %343 = vmatpush1.bf16.msra.mxu0 0
    %344 = vmatprep.subr.bf16.mxu0 0
    %345 = vmatpush1.bf16.msra.mxu0 0
    %346 = vmatprep.subr.bf16.mxu0 0
    %347 = vmatpush1.bf16.msra.mxu0 0
    %348 = vmatprep.subr.bf16.mxu0 0
    %349 = vmatpush1.bf16.msra.mxu0 0
    %350 = vmatprep.subr.bf16.mxu0 0
    %351 = vmatpush1.bf16.msra.mxu0 0
    %352 = vmatprep.subr.bf16.mxu0 0
    %353 = vmatpush1.bf16.msra.mxu0 0
    %354 = vmatprep.subr.bf16.mxu0 0
    %355 = vmatpush1.bf16.msra.mxu0 0
    %356 = vmatprep.subr.bf16.mxu0 0
    %357 = vmatpush1.bf16.msra.mxu0 0
    %358 = vmatprep.subr.bf16.mxu0 0
    %359 = vmatpush1.bf16.msra.mxu0 0
    %360 = vmatprep.subr.bf16.mxu0 0
    %361 = vmatpush1.bf16.msra.mxu0 0
    %362 = vmatprep.subr.bf16.mxu0 0
    %363 = vmatpush1.bf16.msra.mxu0 0
    %364 = vmatprep.mubr.bf16.mxu0 0
    %365 = vmatmul.mubr.bf16.gmra.mrb[0].mxu0 %v330
    %v366 = vpop.f32.mrb[0].mxu0
    %v367 = vadd.f32 %v316, %v366
    %v368 = vpop.f32.mrb[0].mxu0
    %v369 = vpop.f32.mrb[0].mxu0
    %v370 = vadd.f32 %v316, %v369
    %v371 = vpop.f32.mrb[0].mxu0
    %372 = vdwg.mxu0
    %v373 = vmax.f32 %v367, 0.0
    %v374 = vmax.f32 %v370, 0.0
    %v375 = vpack.c.bf16 %v230, %v229
    %v376 = vld [vmem:[#allocation4] sm:$0xf]
    %v377 = vld [vmem:[#allocation4 + $0x4] sm:$0xf]
    %v378 = vld [vmem:[#allocation4 + $0x8] sm:$0xf]
    %v379 = vld [vmem:[#allocation4 + $0xc] sm:$0xf]
    %v380 = vpack.c.bf16 %v374, %v373
    %v381 = vld [vmem:[#allocation6] sm:$0xf]
    %v382 = vld [vmem:[#allocation6 + $0x4] sm:$0xf]
    %v383 = vld [vmem:[#allocation6 + $0x8] sm:$0xf]
    %v384 = vld [vmem:[#allocation6 + $0xc] sm:$0xf]
    %v389 = vunpack.c.l.b16 %v381
    %v390 = vunpack.c.l.b16 %v382
    %v391 = vunpack.c.l.b16 %v383
    %v392 = vunpack.c.l.b16 %v384
    %v393 = vpack.c.b16 %v390, %v389
    %v394 = vpack.c.b16 %v392, %v391
    %v398 = vsel %vm116, %v380, 0
    %400 = vmatprep.subr.bf16.mxu0 0
    %401 = vmatpush1.bf16.msra.mxu0 %v393
    %402 = vmatprep.subr.bf16.mxu0 0
    %403 = vmatpush1.bf16.msra.mxu0 %v394
    %404 = vmatprep.subr.bf16.mxu0 0
    %405 = vmatpush1.bf16.msra.mxu0 0
    %406 = vmatprep.subr.bf16.mxu0 0
    %407 = vmatpush1.bf16.msra.mxu0 0
    %408 = vmatprep.subr.bf16.mxu0 0
    %409 = vmatpush1.bf16.msra.mxu0 0
    %410 = vmatprep.subr.bf16.mxu0 0
    %411 = vmatpush1.bf16.msra.mxu0 0
    %412 = vmatprep.subr.bf16.mxu0 0
    %413 = vmatpush1.bf16.msra.mxu0 0
    %414 = vmatprep.subr.bf16.mxu0 0
    %415 = vmatpush1.bf16.msra.mxu0 0
    %416 = vmatprep.subr.bf16.mxu0 0
    %417 = vmatpush1.bf16.msra.mxu0 0
    %418 = vmatprep.subr.bf16.mxu0 0
    %419 = vmatpush1.bf16.msra.mxu0 0
    %420 = vmatprep.subr.bf16.mxu0 0
    %421 = vmatpush1.bf16.msra.mxu0 0
    %422 = vmatprep.subr.bf16.mxu0 0
    %423 = vmatpush1.bf16.msra.mxu0 0
    %424 = vmatprep.subr.bf16.mxu0 0
    %425 = vmatpush1.bf16.msra.mxu0 0
    %426 = vmatprep.subr.bf16.mxu0 0
    %427 = vmatpush1.bf16.msra.mxu0 0
    %428 = vmatprep.subr.bf16.mxu0 0
    %429 = vmatpush1.bf16.msra.mxu0 0
    %430 = vmatprep.subr.bf16.mxu0 0
    %431 = vmatpush1.bf16.msra.mxu0 0
    %432 = vmatprep.mubr.bf16.mxu0 0
    %433 = vmatmul.mubr.bf16.gmra.mrb[0].mxu0 %v398
    %v434 = vpop.f32.mrb[0].mxu0
    %v435 = vadd.f32 0.0, %v434
    %v436 = vpop.f32.mrb[0].mxu0
    %v437 = vpop.f32.mrb[0].mxu0
    %v438 = vadd.f32 0.0, %v437
    %v439 = vpop.f32.mrb[0].mxu0
    %440 = vdwg.mxu0
    %v445 = vunpack.c.l.b16 %v376
    %v446 = vunpack.c.l.b16 %v377
    %v447 = vunpack.c.l.b16 %v378
    %v448 = vunpack.c.l.b16 %v379
    %v449 = vpack.c.b16 %v446, %v445
    %v450 = vpack.c.b16 %v448, %v447
    %v454 = vsel %vm116, %v375, 0
    %456 = vmatprep.subr.bf16.mxu0 0
    %457 = vmatpush1.bf16.msra.mxu0 %v449
    %458 = vmatprep.subr.bf16.mxu0 0
    %459 = vmatpush1.bf16.msra.mxu0 %v450
    %460 = vmatprep.subr.bf16.mxu0 0
    %461 = vmatpush1.bf16.msra.mxu0 0
    %462 = vmatprep.subr.bf16.mxu0 0
    %463 = vmatpush1.bf16.msra.mxu0 0
    %464 = vmatprep.subr.bf16.mxu0 0
    %465 = vmatpush1.bf16.msra.mxu0 0
    %466 = vmatprep.subr.bf16.mxu0 0
    %467 = vmatpush1.bf16.msra.mxu0 0
    %468 = vmatprep.subr.bf16.mxu0 0
    %469 = vmatpush1.bf16.msra.mxu0 0
    %470 = vmatprep.subr.bf16.mxu0 0
    %471 = vmatpush1.bf16.msra.mxu0 0
    %472 = vmatprep.subr.bf16.mxu0 0
    %473 = vmatpush1.bf16.msra.mxu0 0
    %474 = vmatprep.subr.bf16.mxu0 0
    %475 = vmatpush1.bf16.msra.mxu0 0
    %476 = vmatprep.subr.bf16.mxu0 0
    %477 = vmatpush1.bf16.msra.mxu0 0
    %478 = vmatprep.subr.bf16.mxu0 0
    %479 = vmatpush1.bf16.msra.mxu0 0
    %480 = vmatprep.subr.bf16.mxu0 0
    %481 = vmatpush1.bf16.msra.mxu0 0
    %482 = vmatprep.subr.bf16.mxu0 0
    %483 = vmatpush1.bf16.msra.mxu0 0
    %484 = vmatprep.subr.bf16.mxu0 0
    %485 = vmatpush1.bf16.msra.mxu0 0
    %486 = vmatprep.subr.bf16.mxu0 0
    %487 = vmatpush1.bf16.msra.mxu0 0
    %488 = vmatprep.mubr.bf16.mxu0 0
    %489 = vmatmul.mubr.bf16.gmra.mrb[0].mxu0 %v454
    %v490 = vpop.f32.mrb[0].mxu0
    %v491 = vadd.f32 %v435, %v490
    %v492 = vpop.f32.mrb[0].mxu0
    %v493 = vpop.f32.mrb[0].mxu0
    %v494 = vadd.f32 %v438, %v493
    %v495 = vpop.f32.mrb[0].mxu0
    %496 = vdwg.mxu0
    %v497 = vld [vmem:[#allocation7 + $0x4] sm:$0x1]
    %v498 = vlaneseq
    %v499 = vshrl.u32 %v498, 7
    %v500 = vsub.s32 0, %v499
    %v501 = vrot.slane %v497, %v500
    %v502 = vadd.f32 %v491, %v501
    %v503 = vadd.f32 %v494, %v501
    %v504 = vmax.f32 %v502, 0.0
    %v505 = vmax.f32 %v503, 0.0
    %v506 = vpack.c.bf16 %v505, %v504
    %v507 = vld [vmem:[%s8] sm:$0xf]
    %v508 = vld [vmem:[%s8 + $0x4] sm:$0xf]
    %v509 = vld [vmem:[%s8 + $0x8] sm:$0xf]
    %v510 = vld [vmem:[%s8 + $0xc] sm:$0xf]
    %v511 = vld [vmem:[#allocation7 + $0x5] sm:$0x1]
    %v512 = vlaneseq
    %v513 = vshrl.u32 %v512, 7
    %v514 = vsub.s32 0, %v513
    %v515 = vrot.slane %v511, %v514
    %v520 = vunpack.c.l.b16 %v507
    %v521 = vunpack.c.l.b16 %v508
    %v522 = vunpack.c.l.b16 %v509
    %v523 = vunpack.c.l.b16 %v510
    %v524 = vpack.c.b16 %v521, %v520
    %v525 = vpack.c.b16 %v523, %v522
    %v529 = vsel %vm116, %v506, 0
    %531 = vmatprep.subr.bf16.mxu0 0
    %532 = vmatpush1.bf16.msra.mxu0 %v524
    %533 = vmatprep.subr.bf16.mxu0 0
    %534 = vmatpush1.bf16.msra.mxu0 %v525
    %535 = vmatprep.subr.bf16.mxu0 0
    %536 = vmatpush1.bf16.msra.mxu0 0
    %537 = vmatprep.subr.bf16.mxu0 0
    %538 = vmatpush1.bf16.msra.mxu0 0
    %539 = vmatprep.subr.bf16.mxu0 0
    %540 = vmatpush1.bf16.msra.mxu0 0
    %541 = vmatprep.subr.bf16.mxu0 0
    %542 = vmatpush1.bf16.msra.mxu0 0
    %543 = vmatprep.subr.bf16.mxu0 0
    %544 = vmatpush1.bf16.msra.mxu0 0
    %545 = vmatprep.subr.bf16.mxu0 0
    %546 = vmatpush1.bf16.msra.mxu0 0
    %547 = vmatprep.subr.bf16.mxu0 0
    %548 = vmatpush1.bf16.msra.mxu0 0
    %549 = vmatprep.subr.bf16.mxu0 0
    %550 = vmatpush1.bf16.msra.mxu0 0
    %551 = vmatprep.subr.bf16.mxu0 0
    %552 = vmatpush1.bf16.msra.mxu0 0
    %553 = vmatprep.subr.bf16.mxu0 0
    %554 = vmatpush1.bf16.msra.mxu0 0
    %555 = vmatprep.subr.bf16.mxu0 0
    %556 = vmatpush1.bf16.msra.mxu0 0
    %557 = vmatprep.subr.bf16.mxu0 0
    %558 = vmatpush1.bf16.msra.mxu0 0
    %559 = vmatprep.subr.bf16.mxu0 0
    %560 = vmatpush1.bf16.msra.mxu0 0
    %561 = vmatprep.subr.bf16.mxu0 0
    %562 = vmatpush1.bf16.msra.mxu0 0
    %563 = vmatprep.mubr.bf16.mxu0 0
    %564 = vmatmul.mubr.bf16.gmra.mrb[0].mxu0 %v529
    %v565 = vpop.f32.mrb[0].mxu0
    %v566 = vadd.f32 %v515, %v565
    %v567 = vpop.f32.mrb[0].mxu0
    %v568 = vpop.f32.mrb[0].mxu0
    %v569 = vadd.f32 %v515, %v568
    %v570 = vpop.f32.mrb[0].mxu0
    %571 = vdwg.mxu0
    %vm572 = vcmask 64512
    %573 = vst.msk [vmem:[%s10] sm:$0xff] %vm572, %v566
    %574 = vst.msk [vmem:[%s10 + $0x8] sm:$0xff] %vm572, %v569
    // Predicated region
    $region58: #{sentence_transformer_forward.1} parent=1 // pred_check
      _
    $region59: #{sentence_transformer_forward.1} parent=1 // pred_check_branch
      %576 = sbr.rel (0) target = $region61
    $region60: #{sentence_transformer_forward.1} parent=1 // pred_region
      _
    $region61: #{sentence_transformer_forward.1} parent=1 // pred_fallthru
      _
    // Predicated region
    $region62: #{sentence_transformer_forward.1} parent=1 // pred_check
      _
    $region63: #{sentence_transformer_forward.1} parent=1 // pred_check_branch
      %578 = sbr.rel (0) target = $region65
    $region64: #{sentence_transformer_forward.1} parent=1 // pred_region
      _
    $region65: #{sentence_transformer_forward.1} parent=1 // pred_fallthru
      _
    %579 = vsyncpa [#allocation3], 1
    %580 = vsyncpa [#allocation5], 1
    %581 = vsyncpa [#allocation8], 1

</llo_original>
